<compile_context>
chip_gen: v7x
topology: tpu7x:2x2x1
jax: 0.10.0
libtpu: 0.0.40
codegen_flags: <defaults>
</compile_context>

<pallas_src>
import functools

import jax
import jax.numpy as jnp
from jax import lax
from jax.experimental import pallas as pl
from jax.experimental.pallas import tpu as pltpu

# All operands are small -> single whole-array VMEM tiles, no grid needed.
_VMEM = pl.BlockSpec(memory_space=pltpu.MemorySpace.VMEM)


# ------------------------------ Fused kernel ------------------------------- #
def _training_net_kernel(x_ref, z0_ref, ws_ref, wg_ref, bg_ref,
                         gen_ref, r1_ref, r2_ref, r3_ref,
                         zz_ref, *, max_inner_step, z_step_size):
    """Whole TRAINING_NET forward in one kernel.

    x_ref : [B, D]   flattened sinogram_3d_img (f32)
    z0_ref: [B, L]   init_z (f32)
    ws_ref: [D, P]   sensing matrix (bf16)
    wg_ref: [L, D]   generator weight (bf16)
    bg_ref: [1, D]   generator bias (f32)
    outs  : gen / r1 / r2 / r3 per-batch losses, each [B, 1] f32
    zz_ref: [2B, L]  f32 VMEM scratch for the stacked generator LHS
    """
    f32 = jnp.float32
    bf16 = jnp.bfloat16

    x = x_ref[...]                                   # [B, D] f32
    ws = ws_ref[...]                                 # [D, P] bf16
    wg = wg_ref[...]                                 # [L, D] bf16
    bg = bg_ref[...]                                 # [1, D] f32
    b = x.shape[0]

    # z = _project_z(init_z, 'clip')
    z0 = jnp.clip(z0_ref[...], -1.0, 1.0)            # [B, L] f32

    # ---- D-contraction matmuls: bf16 operands, f32 accumulation, done once.
    m_t = jnp.dot(x.astype(bf16), ws, preferred_element_type=f32)        # [B, P]
    M = jnp.dot(wg, ws, preferred_element_type=f32)                      # [L, P]
    b_m = jnp.dot(bg.astype(bf16), ws, preferred_element_type=f32)       # [1, P]
    c = b_m - m_t                                                        # [B, P]

    # ---- Fold the per-step gradient into ONE matmul:
    #   m_s = z @ M + b_m,  d/dz sum((m_s - m_t)^2) = 2*(z@M + c) @ M^T
    #                                               = z @ (2 M M^T) + 2 c M^T
    A2 = 2.0 * lax.dot_general(M, M, (((1,), (1,)), ((), ())),
                               preferred_element_type=f32)               # [L, L]
    d0 = 2.0 * lax.dot_general(c, M, (((1,), (1,)), ((), ())),
                               preferred_element_type=f32)               # [B, L]

    def gd_step(z):
        g = jnp.dot(z, A2, preferred_element_type=f32) + d0              # [B, L]
        return jnp.clip(z - z_step_size * g, -1.0, 1.0)                  # step+clip

    z = z0
    if max_inner_step <= 8:
        # Small static trip count: Python unroll (full LLO visibility).
        for _ in range(max_inner_step):
            z = gd_step(z)
    else:
        # Larger trip counts: bounded live ranges via fori_loop.
        z = lax.fori_loop(0, max_inner_step, lambda _, zc: gd_step(zc), z)

    # ---- Epilogue.
    # Single weight-stationary MXU pass over wg for both generator evals.
    zz_ref[0:b, :] = z
    zz_ref[b:2 * b, :] = z0
    imgs = jnp.dot(zz_ref[...].astype(bf16), wg,
                   preferred_element_type=f32) + bg                      # [2B, D]
    sino_nn = imgs[0:b, :]                                               # gen(z)
    init_samples = imgs[b:2 * b, :]                                      # gen(z0)

    # Measurements of the generated images via the resident iteration matrix
    # (no epilogue dependence on ws at all).
    m_nn = jnp.dot(z, M, preferred_element_type=f32) + b_m               # [B, P]
    m_init = jnp.dot(z0, M, preferred_element_type=f32) + b_m            # [B, P]

    def sq_sum(d):                                                        # [B, 1]
        return jnp.sum(d * d, axis=1, keepdims=True)

    def rip(dx, dm):                                                      # [B, 1]
        diff = jnp.sqrt(sq_sum(dx)) - jnp.sqrt(sq_sum(dm))
        return diff * diff

    gen_ref[...] = sq_sum(m_t - m_nn)                    # measurement error
    r1_ref[...] = rip(sino_nn - init_samples, m_nn - m_init)
    r2_ref[...] = rip(sino_nn - x, m_nn - m_t)
    r3_ref[...] = rip(init_samples - x, m_init - m_t)


def _run_fused_forward(x_flat, init_z, ws, wg, bg, *, max_inner_setp,
                       z_step_size):
    b, d = x_flat.shape
    p = ws.shape[1]
    l = wg.shape[0]

    # VMEM footprint: x(f32) + a few [B,D]/[2B,D] f32 intermediates,
    # ws/wg in bf16 (x2 slack), plus small stuff + 1 MiB headroom.
    foot = (6 * b * d * 4) + (2 * d * p * 2) + (2 * l * d * 2) + (8 * d) + (1 << 20)
    vmem_limit = int(min(max(foot, 32 << 20), 64 << 20))

    out1 = jax.ShapeDtypeStruct((b, 1), jnp.float32)
    return pl.pallas_call(
        functools.partial(
            _training_net_kernel,
            max_inner_step=int(max_inner_setp),
            z_step_size=float(z_step_size),
        ),
        out_shape=(out1, out1, out1, out1),
        in_specs=[_VMEM] * 5,
        out_specs=(_VMEM, _VMEM, _VMEM, _VMEM),
        scratch_shapes=[pltpu.VMEM((2 * b, l), jnp.float32)],
        compiler_params=pltpu.CompilerParams(vmem_limit_bytes=vmem_limit),
    )(
        x_flat.astype(jnp.float32),
        init_z.astype(jnp.float32),
        ws.astype(jnp.bfloat16),           # MXU-only operand -> bf16
        wg.astype(jnp.bfloat16),           # MXU-only operand -> bf16
        bg.reshape(1, d).astype(jnp.float32),
    )


# ------------------------------ Model glue --------------------------------- #
def init_params(key, latent_code_len, pattern_num, img_shape):
    """Deterministic parameter init (synthetic; no checkpoint load)."""
    c, h, w = img_shape
    d = c * h * w
    k1, k2, k3 = jax.random.split(key, 3)
    ws = jax.random.normal(k1, (d, pattern_num), jnp.float32) / jnp.sqrt(d)
    wg = jax.random.normal(k2, (latent_code_len, d), jnp.float32) / jnp.sqrt(
        latent_code_len
    )
    bg = jax.random.normal(k3, (d,), jnp.float32) * 0.01
    return {"ws": ws, "wg": wg, "bg": bg}


def training_net_forward(params, sinogram_3d_img, init_z, *, max_inner_setp,
                         z_step_size):
    b = sinogram_3d_img.shape[0]
    ws, wg, bg = params["ws"], params["wg"], params["bg"]
    x_flat = sinogram_3d_img.reshape(b, -1).astype(jnp.float32)

    gen, r1, r2, r3 = _run_fused_forward(
        x_flat, init_z, ws, wg, bg,
        max_inner_setp=max_inner_setp, z_step_size=z_step_size)

    gen = gen[:, 0]        # per-batch measurement error (m_t vs m_nn)
    r1 = r1[:, 0]
    r2 = r2[:, 0]
    r3 = r3[:, 0]

    generator_loss = jnp.mean(gen)
    rip_loss = jnp.mean((r1 + r2 + r3) / 3.0)
    total_loss = generator_loss + rip_loss

    return {
        "total_loss": total_loss,
        "r1": r1,
        "r2": r2,
        "r3": r3,
        "rip_loss": rip_loss,
        "generator_loss": generator_loss,
    }


if __name__ == "__main__":
    args = dict(
        loss_lambda=1.0,
        latent_code_len=32,
        pattern_num=32,
        project_method="clip",
        max_inner_setp=3,
        z_step_size=0.1,
    )
    B, C, H, W = 2, 1, 16, 16

    key = jax.random.PRNGKey(0)
    kp, kx, kz = jax.random.split(key, 3)
    params = init_params(kp, args["latent_code_len"], args["pattern_num"], (C, H, W))
    sinogram_3d_img = jax.random.normal(kx, (B, C, H, W), jnp.float32)
    init_z = jax.random.normal(kz, (B, args["latent_code_len"]), jnp.float32)

    fwd = jax.jit(
        functools.partial(
            training_net_forward,
            max_inner_setp=args["max_inner_setp"],
            z_step_size=args["z_step_size"],
        )
    )
    loss_pkg = fwd(params, sinogram_3d_img, init_z)
    jax.block_until_ready(loss_pkg)
    print("KERNEL_OK")
</pallas_src>

<mosaic_0001>
module attributes {stable_mosaic.version = 11 : i64} {
  func.func @_training_net_kernel(%arg0: memref<2x256xf32, #tpu.memory_space<vmem>>, %arg1: memref<2x32xf32, #tpu.memory_space<vmem>>, %arg2: memref<256x32xbf16, #tpu.memory_space<vmem>>, %arg3: memref<32x256xbf16, #tpu.memory_space<vmem>>, %arg4: memref<1x256xf32, #tpu.memory_space<vmem>>, %arg5: memref<2x1xf32, #tpu.memory_space<vmem>>, %arg6: memref<2x1xf32, #tpu.memory_space<vmem>>, %arg7: memref<2x1xf32, #tpu.memory_space<vmem>>, %arg8: memref<2x1xf32, #tpu.memory_space<vmem>>, %arg9: memref<4x32xf32, #tpu.memory_space<vmem>>) attributes {dimension_semantics = [], scalar_prefetch = 0 : i64, scratch_operands = 1 : i64, tpu.core_type = #tpu.core_type<tc>} {
    %c0 = arith.constant 0 : index
    %c0_0 = arith.constant 0 : index
    %0 = vector.load %arg0[%c0, %c0_0] : memref<2x256xf32, #tpu.memory_space<vmem>>, vector<2x256xf32>
    %c0_1 = arith.constant 0 : index
    %c0_2 = arith.constant 0 : index
    %1 = vector.load %arg2[%c0_1, %c0_2] : memref<256x32xbf16, #tpu.memory_space<vmem>>, vector<256x32xbf16>
    %c0_3 = arith.constant 0 : index
    %c0_4 = arith.constant 0 : index
    %2 = vector.load %arg3[%c0_3, %c0_4] : memref<32x256xbf16, #tpu.memory_space<vmem>>, vector<32x256xbf16>
    %c0_5 = arith.constant 0 : index
    %c0_6 = arith.constant 0 : index
    %3 = vector.load %arg4[%c0_5, %c0_6] : memref<1x256xf32, #tpu.memory_space<vmem>>, vector<1x256xf32>
    %c0_7 = arith.constant 0 : index
    %c0_8 = arith.constant 0 : index
    %4 = vector.load %arg1[%c0_7, %c0_8] : memref<2x32xf32, #tpu.memory_space<vmem>>, vector<2x32xf32>
    %cst = arith.constant -1.000000e+00 : f32
    %cst_9 = arith.constant 1.000000e+00 : f32
    %5 = vector.broadcast %cst : f32 to vector<2x32xf32>
    %6 = arith.maximumf %5, %4 : vector<2x32xf32>
    %7 = vector.broadcast %cst_9 : f32 to vector<2x32xf32>
    %8 = arith.minimumf %7, %6 : vector<2x32xf32>
    %9 = arith.truncf %0 : vector<2x256xf32> to vector<2x256xbf16>
    %cst_10 = arith.constant dense<0.000000e+00> : vector<2x32xf32>
    %10 = tpu.matmul %9, %1, %cst_10 {dimension_numbers = #tpu.dot_dimension_numbers<[1], [0], [0], [1], [0, 0, 1, 1], [], []>} : vector<2x256xbf16>, vector<256x32xbf16>, vector<2x32xf32> -> vector<2x32xf32>
    %cst_11 = arith.constant dense<0.000000e+00> : vector<32x32xf32>
    %11 = tpu.matmul %2, %1, %cst_11 {dimension_numbers = #tpu.dot_dimension_numbers<[1], [0], [0], [1], [0, 0, 1, 1], [], []>} : vector<32x256xbf16>, vector<256x32xbf16>, vector<32x32xf32> -> vector<32x32xf32>
    %12 = arith.truncf %3 : vector<1x256xf32> to vector<1x256xbf16>
    %cst_12 = arith.constant dense<0.000000e+00> : vector<1x32xf32>
    %13 = tpu.matmul %12, %1, %cst_12 {dimension_numbers = #tpu.dot_dimension_numbers<[1], [0], [0], [1], [0, 0, 1, 1], [], []>} : vector<1x256xbf16>, vector<256x32xbf16>, vector<1x32xf32> -> vector<1x32xf32>
    %14 = vector.broadcast %13 : vector<1x32xf32> to vector<2x32xf32>
    %15 = arith.subf %14, %10 : vector<2x32xf32>
    %cst_13 = arith.constant dense<0.000000e+00> : vector<32x32xf32>
    %16 = tpu.matmul %11, %11, %cst_13 {dimension_numbers = #tpu.dot_dimension_numbers<[1], [1], [0], [0], [0, 0, 1, 0], [], []>} : vector<32x32xf32>, vector<32x32xf32>, vector<32x32xf32> -> vector<32x32xf32>
    %cst_14 = arith.constant 2.000000e+00 : f32
    %17 = vector.broadcast %cst_14 : f32 to vector<32x32xf32>
    %18 = arith.mulf %17, %16 : vector<32x32xf32>
    %cst_15 = arith.constant dense<0.000000e+00> : vector<2x32xf32>
    %19 = tpu.matmul %15, %11, %cst_15 {dimension_numbers = #tpu.dot_dimension_numbers<[1], [1], [0], [0], [0, 0, 1, 0], [], []>} : vector<2x32xf32>, vector<32x32xf32>, vector<2x32xf32> -> vector<2x32xf32>
    %cst_16 = arith.constant 2.000000e+00 : f32
    %20 = vector.broadcast %cst_16 : f32 to vector<2x32xf32>
    %21 = arith.mulf %20, %19 : vector<2x32xf32>
    %cst_17 = arith.constant dense<0.000000e+00> : vector<2x32xf32>
    %22 = tpu.matmul %8, %18, %cst_17 {dimension_numbers = #tpu.dot_dimension_numbers<[1], [0], [0], [1], [0, 0, 1, 1], [], []>} : vector<2x32xf32>, vector<32x32xf32>, vector<2x32xf32> -> vector<2x32xf32>
    %23 = arith.addf %22, %21 : vector<2x32xf32>
    %cst_18 = arith.constant 1.000000e-01 : f32
    %24 = vector.broadcast %cst_18 : f32 to vector<2x32xf32>
    %25 = arith.mulf %24, %23 : vector<2x32xf32>
    %26 = arith.subf %8, %25 : vector<2x32xf32>
    %cst_19 = arith.constant -1.000000e+00 : f32
    %cst_20 = arith.constant 1.000000e+00 : f32
    %27 = vector.broadcast %cst_19 : f32 to vector<2x32xf32>
    %28 = arith.maximumf %27, %26 : vector<2x32xf32>
    %29 = vector.broadcast %cst_20 : f32 to vector<2x32xf32>
    %30 = arith.minimumf %29, %28 : vector<2x32xf32>
    %cst_21 = arith.constant dense<0.000000e+00> : vector<2x32xf32>
    %31 = tpu.matmul %30, %18, %cst_21 {dimension_numbers = #tpu.dot_dimension_numbers<[1], [0], [0], [1], [0, 0, 1, 1], [], []>} : vector<2x32xf32>, vector<32x32xf32>, vector<2x32xf32> -> vector<2x32xf32>
    %32 = arith.addf %31, %21 : vector<2x32xf32>
    %cst_22 = arith.constant 1.000000e-01 : f32
    %33 = vector.broadcast %cst_22 : f32 to vector<2x32xf32>
    %34 = arith.mulf %33, %32 : vector<2x32xf32>
    %35 = arith.subf %30, %34 : vector<2x32xf32>
    %cst_23 = arith.constant -1.000000e+00 : f32
    %cst_24 = arith.constant 1.000000e+00 : f32
    %36 = vector.broadcast %cst_23 : f32 to vector<2x32xf32>
    %37 = arith.maximumf %36, %35 : vector<2x32xf32>
    %38 = vector.broadcast %cst_24 : f32 to vector<2x32xf32>
    %39 = arith.minimumf %38, %37 : vector<2x32xf32>
    %cst_25 = arith.constant dense<0.000000e+00> : vector<2x32xf32>
    %40 = tpu.matmul %39, %18, %cst_25 {dimension_numbers = #tpu.dot_dimension_numbers<[1], [0], [0], [1], [0, 0, 1, 1], [], []>} : vector<2x32xf32>, vector<32x32xf32>, vector<2x32xf32> -> vector<2x32xf32>
    %41 = arith.addf %40, %21 : vector<2x32xf32>
    %cst_26 = arith.constant 1.000000e-01 : f32
    %42 = vector.broadcast %cst_26 : f32 to vector<2x32xf32>
    %43 = arith.mulf %42, %41 : vector<2x32xf32>
    %44 = arith.subf %39, %43 : vector<2x32xf32>
    %cst_27 = arith.constant -1.000000e+00 : f32
    %cst_28 = arith.constant 1.000000e+00 : f32
    %45 = vector.broadcast %cst_27 : f32 to vector<2x32xf32>
    %46 = arith.maximumf %45, %44 : vector<2x32xf32>
    %47 = vector.broadcast %cst_28 : f32 to vector<2x32xf32>
    %48 = arith.minimumf %47, %46 : vector<2x32xf32>
    %c0_29 = arith.constant 0 : index
    %c0_30 = arith.constant 0 : index
    %49 = vector.load %arg9[%c0_29, %c0_30] : memref<4x32xf32, #tpu.memory_space<vmem>>, vector<2x32xf32>
    tpu.vector_store %arg9[%c0_29, %c0_30], %48 {strides = array<i32>} : memref<4x32xf32, #tpu.memory_space<vmem>>, vector<2x32xf32>,
    %c2 = arith.constant 2 : index
    %c0_31 = arith.constant 0 : index
    %50 = vector.load %arg9[%c2, %c0_31] : memref<4x32xf32, #tpu.memory_space<vmem>>, vector<2x32xf32>
    tpu.vector_store %arg9[%c2, %c0_31], %8 {strides = array<i32>} : memref<4x32xf32, #tpu.memory_space<vmem>>, vector<2x32xf32>,
    %c0_32 = arith.constant 0 : index
    %c0_33 = arith.constant 0 : index
    %51 = vector.load %arg9[%c0_32, %c0_33] : memref<4x32xf32, #tpu.memory_space<vmem>>, vector<4x32xf32>
    %52 = arith.truncf %51 : vector<4x32xf32> to vector<4x32xbf16>
    %cst_34 = arith.constant dense<0.000000e+00> : vector<4x256xf32>
    %53 = tpu.matmul %52, %2, %cst_34 {dimension_numbers = #tpu.dot_dimension_numbers<[1], [0], [0], [1], [0, 0, 1, 1], [], []>} : vector<4x32xbf16>, vector<32x256xbf16>, vector<4x256xf32> -> vector<4x256xf32>
    %54 = vector.broadcast %3 : vector<1x256xf32> to vector<4x256xf32>
    %55 = arith.addf %53, %54 : vector<4x256xf32>
    %56 = vector.extract_strided_slice %55 {offsets = [0, 0], sizes = [2, 256], strides = [1, 1]} : vector<4x256xf32> to vector<2x256xf32>
    %57 = vector.extract_strided_slice %55 {offsets = [2, 0], sizes = [2, 256], strides = [1, 1]} : vector<4x256xf32> to vector<2x256xf32>
    %cst_35 = arith.constant dense<0.000000e+00> : vector<2x32xf32>
    %58 = tpu.matmul %48, %11, %cst_35 {dimension_numbers = #tpu.dot_dimension_numbers<[1], [0], [0], [1], [0, 0, 1, 1], [], []>} : vector<2x32xf32>, vector<32x32xf32>, vector<2x32xf32> -> vector<2x32xf32>
    %59 = vector.broadcast %13 : vector<1x32xf32> to vector<2x32xf32>
    %60 = arith.addf %58, %59 : vector<2x32xf32>
    %cst_36 = arith.constant dense<0.000000e+00> : vector<2x32xf32>
    %61 = tpu.matmul %8, %11, %cst_36 {dimension_numbers = #tpu.dot_dimension_numbers<[1], [0], [0], [1], [0, 0, 1, 1], [], []>} : vector<2x32xf32>, vector<32x32xf32>, vector<2x32xf32> -> vector<2x32xf32>
    %62 = vector.broadcast %13 : vector<1x32xf32> to vector<2x32xf32>
    %63 = arith.addf %61, %62 : vector<2x32xf32>
    %64 = arith.subf %10, %60 : vector<2x32xf32>
    %65 = arith.mulf %64, %64 : vector<2x32xf32>
    %cst_37 = arith.constant dense<0.000000e+00> : vector<2xf32>
    %66 = vector.multi_reduction <add>, %65, %cst_37 [1] : vector<2x32xf32> to vector<2xf32>
    %67 = vector.shape_cast %66 : vector<2xf32> to vector<2x1xf32>
    %c0_38 = arith.constant 0 : index
    %c0_39 = arith.constant 0 : index
    %68 = vector.load %arg5[%c0_38, %c0_39] : memref<2x1xf32, #tpu.memory_space<vmem>>, vector<2x1xf32>
    tpu.vector_store %arg5[%c0_38, %c0_39], %67 {strides = array<i32>} : memref<2x1xf32, #tpu.memory_space<vmem>>, vector<2x1xf32>,
    %69 = arith.subf %56, %57 : vector<2x256xf32>
    %70 = arith.subf %60, %63 : vector<2x32xf32>
    %71 = arith.mulf %69, %69 : vector<2x256xf32>
    %cst_40 = arith.constant dense<0.000000e+00> : vector<2xf32>
    %72 = vector.multi_reduction <add>, %71, %cst_40 [1] : vector<2x256xf32> to vector<2xf32>
    %73 = vector.shape_cast %72 : vector<2xf32> to vector<2x1xf32>
    %74 = math.sqrt %73 : vector<2x1xf32>
    %75 = arith.mulf %70, %70 : vector<2x32xf32>
    %cst_41 = arith.constant dense<0.000000e+00> : vector<2xf32>
    %76 = vector.multi_reduction <add>, %75, %cst_41 [1] : vector<2x32xf32> to vector<2xf32>
    %77 = vector.shape_cast %76 : vector<2xf32> to vector<2x1xf32>
    %78 = math.sqrt %77 : vector<2x1xf32>
    %79 = arith.subf %74, %78 : vector<2x1xf32>
    %80 = arith.mulf %79, %79 : vector<2x1xf32>
    %c0_42 = arith.constant 0 : index
    %c0_43 = arith.constant 0 : index
    %81 = vector.load %arg6[%c0_42, %c0_43] : memref<2x1xf32, #tpu.memory_space<vmem>>, vector<2x1xf32>
    tpu.vector_store %arg6[%c0_42, %c0_43], %80 {strides = array<i32>} : memref<2x1xf32, #tpu.memory_space<vmem>>, vector<2x1xf32>,
    %82 = arith.subf %56, %0 : vector<2x256xf32>
    %83 = arith.subf %60, %10 : vector<2x32xf32>
    %84 = arith.mulf %82, %82 : vector<2x256xf32>
    %cst_44 = arith.constant dense<0.000000e+00> : vector<2xf32>
    %85 = vector.multi_reduction <add>, %84, %cst_44 [1] : vector<2x256xf32> to vector<2xf32>
    %86 = vector.shape_cast %85 : vector<2xf32> to vector<2x1xf32>
    %87 = math.sqrt %86 : vector<2x1xf32>
    %88 = arith.mulf %83, %83 : vector<2x32xf32>
    %cst_45 = arith.constant dense<0.000000e+00> : vector<2xf32>
    %89 = vector.multi_reduction <add>, %88, %cst_45 [1] : vector<2x32xf32> to vector<2xf32>
    %90 = vector.shape_cast %89 : vector<2xf32> to vector<2x1xf32>
    %91 = math.sqrt %90 : vector<2x1xf32>
    %92 = arith.subf %87, %91 : vector<2x1xf32>
    %93 = arith.mulf %92, %92 : vector<2x1xf32>
    %c0_46 = arith.constant 0 : index
    %c0_47 = arith.constant 0 : index
    %94 = vector.load %arg7[%c0_46, %c0_47] : memref<2x1xf32, #tpu.memory_space<vmem>>, vector<2x1xf32>
    tpu.vector_store %arg7[%c0_46, %c0_47], %93 {strides = array<i32>} : memref<2x1xf32, #tpu.memory_space<vmem>>, vector<2x1xf32>,
    %95 = arith.subf %57, %0 : vector<2x256xf32>
    %96 = arith.subf %63, %10 : vector<2x32xf32>
    %97 = arith.mulf %95, %95 : vector<2x256xf32>
    %cst_48 = arith.constant dense<0.000000e+00> : vector<2xf32>
    %98 = vector.multi_reduction <add>, %97, %cst_48 [1] : vector<2x256xf32> to vector<2xf32>
    %99 = vector.shape_cast %98 : vector<2xf32> to vector<2x1xf32>
    %100 = math.sqrt %99 : vector<2x1xf32>
    %101 = arith.mulf %96, %96 : vector<2x32xf32>
    %cst_49 = arith.constant dense<0.000000e+00> : vector<2xf32>
    %102 = vector.multi_reduction <add>, %101, %cst_49 [1] : vector<2x32xf32> to vector<2xf32>
    %103 = vector.shape_cast %102 : vector<2xf32> to vector<2x1xf32>
    %104 = math.sqrt %103 : vector<2x1xf32>
    %105 = arith.subf %100, %104 : vector<2x1xf32>
    %106 = arith.mulf %105, %105 : vector<2x1xf32>
    %c0_50 = arith.constant 0 : index
    %c0_51 = arith.constant 0 : index
    %107 = vector.load %arg8[%c0_50, %c0_51] : memref<2x1xf32, #tpu.memory_space<vmem>>, vector<2x1xf32>
    tpu.vector_store %arg8[%c0_50, %c0_51], %106 {strides = array<i32>} : memref<2x1xf32, #tpu.memory_space<vmem>>, vector<2x1xf32>,
    return
  }
}

</mosaic_0001>

<llo_original>
// kernel: training_net_forward.1
$region0: #{training_net_forward.1}
  #allocation0 [shape = 'u32[]', space=smem, size = 0x4, offset = 0x4, fixed_abs, tag = 'smem constant byte address 0x4 - core index']
  #allocation1 [shape = 'u32[144,128]{1,0:T(1,128)}', space=vmem, size = 0x12000, scoped, tag = 'internal scratch']
  #allocation2 [shape = 'f32[4,32]{1,0:T(4,128)}', space=vmem, size = 0x800, scoped, tag = 'scratch operand']
  %s0 = inlined_call_operand.vmem [shape: f32[2,256], index: 0, kind: input, shape index: {}]
  %s1 = inlined_call_operand.vmem [shape: f32[2,32], index: 1, kind: input, shape index: {}]
  %s2 = inlined_call_operand.vmem [shape: bf16[256,32], index: 2, kind: input, shape index: {}]
  %s3 = inlined_call_operand.vmem [shape: bf16[32,256], index: 3, kind: input, shape index: {}]
  %s4 = inlined_call_operand.vmem [shape: f32[1,256], index: 4, kind: input, shape index: {}]
  %s5 = inlined_call_operand.vmem [shape: f32[2,1], index: 5, kind: output, shape index: {0}]
  %s6 = inlined_call_operand.vmem [shape: f32[2,1], index: 6, kind: output, shape index: {1}]
  %s7 = inlined_call_operand.vmem [shape: f32[2,1], index: 7, kind: output, shape index: {2}]
  %s8 = inlined_call_operand.vmem [shape: f32[2,1], index: 8, kind: output, shape index: {3}]
  %9 = xla_tuple %s5, %s6, %s7, %s8
  %s10 = sld [smem:[#allocation0]]
  $region54: #{training_net_forward.1} parent=0
    _
  %s12 = ssub.s32 1, %s10
  %s13 = scalar_select 0, %s12, %s10
  // Predicated region
  $region2: #{training_net_forward.1} parent=0 // pred_check
    _
  $region3: #{training_net_forward.1} parent=0 // pred_check_branch
    %15 = sbr.rel (0) target = $region5
  $region4: #{training_net_forward.1} parent=0 // pred_region
    _
  $region5: #{training_net_forward.1} parent=0 // pred_fallthru
    _
  // Predicated region
  $region6: #{training_net_forward.1} parent=0 // pred_check
    _
  $region7: #{training_net_forward.1} parent=0 // pred_check_branch
    %17 = sbr.rel (0) target = $region9
  $region8: #{training_net_forward.1} parent=0 // pred_region
    _
  $region9: #{training_net_forward.1} parent=0 // pred_fallthru
    _
  // Predicated region
  $region10: #{training_net_forward.1} parent=0 // pred_check
    _
  $region11: #{training_net_forward.1} parent=0 // pred_check_branch
    %19 = sbr.rel (0) target = $region13
  $region12: #{training_net_forward.1} parent=0 // pred_region
    _
  $region13: #{training_net_forward.1} parent=0 // pred_fallthru
    _
  // Predicated region
  $region14: #{training_net_forward.1} parent=0 // pred_check
    _
  $region15: #{training_net_forward.1} parent=0 // pred_check_branch
    %21 = sbr.rel (0) target = $region17
  $region16: #{training_net_forward.1} parent=0 // pred_region
    _
  $region17: #{training_net_forward.1} parent=0 // pred_fallthru
    _
  // Predicated region
  $region18: #{training_net_forward.1} parent=0 // pred_check
    _
  $region19: #{training_net_forward.1} parent=0 // pred_check_branch
    %23 = sbr.rel (0) target = $region21
  $region20: #{training_net_forward.1} parent=0 // pred_region
    _
  $region21: #{training_net_forward.1} parent=0 // pred_fallthru
    _
  %v25 = vld [vmem:[%s0] sm:$0xf]
  %v26 = vld [vmem:[%s2] sm:$0xf]
  %v27 = vld [vmem:[%s2 + $0x4] sm:$0xf]
  %v28 = vld [vmem:[%s2 + $0x8] sm:$0xf]
  %v29 = vld [vmem:[%s2 + $0xc] sm:$0xf]
  %v30 = vld [vmem:[%s2 + $0x10] sm:$0xf]
  %v31 = vld [vmem:[%s2 + $0x14] sm:$0xf]
  %v32 = vld [vmem:[%s2 + $0x18] sm:$0xf]
  %v33 = vld [vmem:[%s2 + $0x1c] sm:$0xf]
  %v34 = vld [vmem:[%s2 + $0x20] sm:$0xf]
  %v35 = vld [vmem:[%s2 + $0x24] sm:$0xf]
  %v36 = vld [vmem:[%s2 + $0x28] sm:$0xf]
  %v37 = vld [vmem:[%s2 + $0x2c] sm:$0xf]
  %v38 = vld [vmem:[%s2 + $0x30] sm:$0xf]
  %v39 = vld [vmem:[%s2 + $0x34] sm:$0xf]
  %v40 = vld [vmem:[%s2 + $0x38] sm:$0xf]
  %v41 = vld [vmem:[%s2 + $0x3c] sm:$0xf]
  %v42 = vld [vmem:[%s2 + $0x40] sm:$0xf]
  %v43 = vld [vmem:[%s2 + $0x44] sm:$0xf]
  %v44 = vld [vmem:[%s2 + $0x48] sm:$0xf]
  %v45 = vld [vmem:[%s2 + $0x4c] sm:$0xf]
  %v46 = vld [vmem:[%s2 + $0x50] sm:$0xf]
  %v47 = vld [vmem:[%s2 + $0x54] sm:$0xf]
  %v48 = vld [vmem:[%s2 + $0x58] sm:$0xf]
  %v49 = vld [vmem:[%s2 + $0x5c] sm:$0xf]
  %v50 = vld [vmem:[%s2 + $0x60] sm:$0xf]
  %v51 = vld [vmem:[%s2 + $0x64] sm:$0xf]
  %v52 = vld [vmem:[%s2 + $0x68] sm:$0xf]
  %v53 = vld [vmem:[%s2 + $0x6c] sm:$0xf]
  %v54 = vld [vmem:[%s2 + $0x70] sm:$0xf]
  %v55 = vld [vmem:[%s2 + $0x74] sm:$0xf]
  %v56 = vld [vmem:[%s2 + $0x78] sm:$0xf]
  %v57 = vld [vmem:[%s2 + $0x7c] sm:$0xf]
  %v58 = vld [vmem:[%s3] sm:$0xff]
  %v59 = vld [vmem:[%s3 + $0x8] sm:$0xff]
  %v60 = vld [vmem:[%s3 + $0x10] sm:$0xff]
  %v61 = vld [vmem:[%s3 + $0x18] sm:$0xff]
  %v62 = vld [vmem:[%s4] sm:$0x3]
  %v63 = vld [vmem:[%s1] sm:$0x3]
  %v64 = vmax.f32 %v63, -1.0
  %v65 = vmin.f32 %v64, 1.0
  %v68 = vunpack.c.l.s4 1983009808
  %v69 = vunpack.c.0.s8 %v68
  %v70 = vlaneseq
  %v71 = vshrl.u32 %v70, 7
  %v72 = vsub.s32 %v69, %v71
  %v73 = vrot.slane %v25, %v72
  %v74 = vcombine.high %v73, %v73
  %v77 = vpack.c.bf16 %v73, %v73
  %v78 = vpack.c.bf16 %v74, %v74
  %v111 = vunpack.c.l.b16 %v26
  %v112 = vunpack.c.l.b16 %v27
  %v113 = vunpack.c.l.b16 %v28
  %v114 = vunpack.c.l.b16 %v29
  %v115 = vunpack.c.l.b16 %v30
  %v116 = vunpack.c.l.b16 %v31
  %v117 = vunpack.c.l.b16 %v32
  %v118 = vunpack.c.l.b16 %v33
  %v119 = vunpack.c.l.b16 %v34
  %v120 = vunpack.c.l.b16 %v35
  %v121 = vunpack.c.l.b16 %v36
  %v122 = vunpack.c.l.b16 %v37
  %v123 = vunpack.c.l.b16 %v38
  %v124 = vunpack.c.l.b16 %v39
  %v125 = vunpack.c.l.b16 %v40
  %v126 = vunpack.c.l.b16 %v41
  %v127 = vunpack.c.l.b16 %v42
  %v128 = vunpack.c.l.b16 %v43
  %v129 = vunpack.c.l.b16 %v44
  %v130 = vunpack.c.l.b16 %v45
  %v131 = vunpack.c.l.b16 %v46
  %v132 = vunpack.c.l.b16 %v47
  %v133 = vunpack.c.l.b16 %v48
  %v134 = vunpack.c.l.b16 %v49
  %v135 = vunpack.c.l.b16 %v50
  %v136 = vunpack.c.l.b16 %v51
  %v137 = vunpack.c.l.b16 %v52
  %v138 = vunpack.c.l.b16 %v53
  %v139 = vunpack.c.l.b16 %v54
  %v140 = vunpack.c.l.b16 %v55
  %v141 = vunpack.c.l.b16 %v56
  %v142 = vunpack.c.l.b16 %v57
  %v143 = vpack.c.b16 %v112, %v111
  %v144 = vpack.c.b16 %v114, %v113
  %v145 = vpack.c.b16 %v116, %v115
  %v146 = vpack.c.b16 %v118, %v117
  %v147 = vpack.c.b16 %v120, %v119
  %v148 = vpack.c.b16 %v122, %v121
  %v149 = vpack.c.b16 %v124, %v123
  %v150 = vpack.c.b16 %v126, %v125
  %v151 = vpack.c.b16 %v128, %v127
  %v152 = vpack.c.b16 %v130, %v129
  %v153 = vpack.c.b16 %v132, %v131
  %v154 = vpack.c.b16 %v134, %v133
  %v155 = vpack.c.b16 %v136, %v135
  %v156 = vpack.c.b16 %v138, %v137
  %v157 = vpack.c.b16 %v140, %v139
  %v158 = vpack.c.b16 %v142, %v141
  %175 = vmatprep.subr.bf16.mxu0 0
  %176 = vmatpush1.bf16.msra.mxu0 %v143
  %177 = vmatprep.subr.bf16.mxu0 0
  %178 = vmatpush1.bf16.msra.mxu0 %v144
  %179 = vmatprep.subr.bf16.mxu0 0
  %180 = vmatpush1.bf16.msra.mxu0 %v145
  %181 = vmatprep.subr.bf16.mxu0 0
  %182 = vmatpush1.bf16.msra.mxu0 %v146
  %183 = vmatprep.subr.bf16.mxu0 0
  %184 = vmatpush1.bf16.msra.mxu0 %v147
  %185 = vmatprep.subr.bf16.mxu0 0
  %186 = vmatpush1.bf16.msra.mxu0 %v148
  %187 = vmatprep.subr.bf16.mxu0 0
  %188 = vmatpush1.bf16.msra.mxu0 %v149
  %189 = vmatprep.subr.bf16.mxu0 0
  %190 = vmatpush1.bf16.msra.mxu0 %v150
  %191 = vmatprep.subr.bf16.mxu0 0
  %192 = vmatpush1.bf16.msra.mxu0 %v151
  %193 = vmatprep.subr.bf16.mxu0 0
  %194 = vmatpush1.bf16.msra.mxu0 %v152
  %195 = vmatprep.subr.bf16.mxu0 0
  %196 = vmatpush1.bf16.msra.mxu0 %v153
  %197 = vmatprep.subr.bf16.mxu0 0
  %198 = vmatpush1.bf16.msra.mxu0 %v154
  %199 = vmatprep.subr.bf16.mxu0 0
  %200 = vmatpush1.bf16.msra.mxu0 %v155
  %201 = vmatprep.subr.bf16.mxu0 0
  %202 = vmatpush1.bf16.msra.mxu0 %v156
  %203 = vmatprep.subr.bf16.mxu0 0
  %204 = vmatpush1.bf16.msra.mxu0 %v157
  %205 = vmatprep.subr.bf16.mxu0 0
  %206 = vmatpush1.bf16.msra.mxu0 %v158
  %207 = vmatprep.mubr.bf16.mxu0 %v78
  %208 = vmatmul.mubr.bf16.gmra.mrb[0].mxu0 %v77
  %v209 = vpop.f32.mrb[0].mxu0
  %v210 = vadd.f32 0.0, %v209
  %v211 = vpop.f32.mrb[0].mxu0
  %v212 = vpop.f32.mrb[0].mxu0
  %v213 = vpop.f32.mrb[0].mxu0
  %214 = vdwg.mxu0
  %v219 = vunpack.c.l.b16 %v58
  %v220 = vunpack.c.h.b16 %v58
  %v221 = vunpack.c.l.b16 %v59
  %v222 = vunpack.c.h.b16 %v59
  %v223 = vunpack.c.l.b16 %v60
  %v224 = vunpack.c.h.b16 %v60
  %v225 = vunpack.c.l.b16 %v61
  %v226 = vunpack.c.h.b16 %v61
  %v227 = vpack.c.b16 %v221, %v219
  %v228 = vpack.c.b16 %v222, %v220
  %v229 = vpack.c.b16 %v225, %v223
  %v230 = vpack.c.b16 %v226, %v224
  %235 = vmatprep.subr.bf16.mxu0 0
  %236 = vmatpush1.bf16.msra.mxu0 %v143
  %237 = vmatprep.subr.bf16.mxu0 0
  %238 = vmatpush1.bf16.msra.mxu0 %v144
  %239 = vmatprep.subr.bf16.mxu0 0
  %240 = vmatpush1.bf16.msra.mxu0 %v145
  %241 = vmatprep.subr.bf16.mxu0 0
  %242 = vmatpush1.bf16.msra.mxu0 %v146
  %243 = vmatprep.subr.bf16.mxu0 0
  %244 = vmatpush1.bf16.msra.mxu0 %v147
  %245 = vmatprep.subr.bf16.mxu0 0
  %246 = vmatpush1.bf16.msra.mxu0 %v148
  %247 = vmatprep.subr.bf16.mxu0 0
  %248 = vmatpush1.bf16.msra.mxu0 %v149
  %249 = vmatprep.subr.bf16.mxu0 0
  %250 = vmatpush1.bf16.msra.mxu0 %v150
  %251 = vmatprep.subr.bf16.mxu0 0
  %252 = vmatpush1.bf16.msra.mxu0 %v151
  %253 = vmatprep.subr.bf16.mxu0 0
  %254 = vmatpush1.bf16.msra.mxu0 %v152
  %255 = vmatprep.subr.bf16.mxu0 0
  %256 = vmatpush1.bf16.msra.mxu0 %v153
  %257 = vmatprep.subr.bf16.mxu0 0
  %258 = vmatpush1.bf16.msra.mxu0 %v154
  %259 = vmatprep.subr.bf16.mxu0 0
  %260 = vmatpush1.bf16.msra.mxu0 %v155
  %261 = vmatprep.subr.bf16.mxu0 0
  %262 = vmatpush1.bf16.msra.mxu0 %v156
  %263 = vmatprep.subr.bf16.mxu0 0
  %264 = vmatpush1.bf16.msra.mxu0 %v157
  %265 = vmatprep.subr.bf16.mxu0 0
  %266 = vmatpush1.bf16.msra.mxu0 %v158
  %267 = vmatprep.mubr.bf16.mxu0 %v228
  %268 = vmatmul.mubr.bf16.gmra.mrb[0].mxu0 %v227
  %v269 = vpop.f32.mrb[0].mxu0
  %v270 = vadd.f32 0.0, %v269
  %v271 = vpop.f32.mrb[0].mxu0
  %v272 = vpop.f32.mrb[0].mxu0
  %v273 = vadd.f32 0.0, %v272
  %v274 = vpop.f32.mrb[0].mxu0
  %275 = vmatprep.mubr.bf16.mxu0 %v230
  %276 = vmatmul.mubr.bf16.gmra.mrb[0].mxu0 %v229
  %v277 = vpop.f32.mrb[0].mxu0
  %v278 = vadd.f32 0.0, %v277
  %v279 = vpop.f32.mrb[0].mxu0
  %v280 = vpop.f32.mrb[0].mxu0
  %v281 = vadd.f32 0.0, %v280
  %v282 = vpop.f32.mrb[0].mxu0
  %283 = vdwg.mxu0
  %v285 = vlaneseq
  %v286 = vshrl.u32 %v285, 7
  %v287 = vsub.s32 0, %v286
  %v288 = vrot.slane %v62, %v287
  %v289 = vlaneseq
  %v290 = vshrl.u32 %v289, 7
  %v291 = vsub.s32 1, %v290
  %v292 = vrot.slane %v62, %v291
  %v295 = vpack.c.bf16 %v288, %v288
  %v296 = vpack.c.bf16 %v292, %v292
  %297 = vmatprep.subr.bf16.mxu0 0
  %298 = vmatpush1.bf16.msra.mxu0 %v143
  %299 = vmatprep.subr.bf16.mxu0 0
  %300 = vmatpush1.bf16.msra.mxu0 %v144
  %301 = vmatprep.subr.bf16.mxu0 0
  %302 = vmatpush1.bf16.msra.mxu0 %v145
  %303 = vmatprep.subr.bf16.mxu0 0
  %304 = vmatpush1.bf16.msra.mxu0 %v146
  %305 = vmatprep.subr.bf16.mxu0 0
  %306 = vmatpush1.bf16.msra.mxu0 %v147
  %307 = vmatprep.subr.bf16.mxu0 0
  %308 = vmatpush1.bf16.msra.mxu0 %v148
  %309 = vmatprep.subr.bf16.mxu0 0
  %310 = vmatpush1.bf16.msra.mxu0 %v149
  %311 = vmatprep.subr.bf16.mxu0 0
  %312 = vmatpush1.bf16.msra.mxu0 %v150
  %313 = vmatprep.subr.bf16.mxu0 0
  %314 = vmatpush1.bf16.msra.mxu0 %v151
  %315 = vmatprep.subr.bf16.mxu0 0
  %316 = vmatpush1.bf16.msra.mxu0 %v152
  %317 = vmatprep.subr.bf16.mxu0 0
  %318 = vmatpush1.bf16.msra.mxu0 %v153
  %319 = vmatprep.subr.bf16.mxu0 0
  %320 = vmatpush1.bf16.msra.mxu0 %v154
  %321 = vmatprep.subr.bf16.mxu0 0
  %322 = vmatpush1.bf16.msra.mxu0 %v155
  %323 = vmatprep.subr.bf16.mxu0 0
  %324 = vmatpush1.bf16.msra.mxu0 %v156
  %325 = vmatprep.subr.bf16.mxu0 0
  %326 = vmatpush1.bf16.msra.mxu0 %v157
  %327 = vmatprep.subr.bf16.mxu0 0
  %328 = vmatpush1.bf16.msra.mxu0 %v158
  %329 = vmatprep.mubr.bf16.mxu0 %v296
  %330 = vmatmul.mubr.bf16.gmra.mrb[0].mxu0 %v295
  %v331 = vpop.f32.mrb[0].mxu0
  %v332 = vadd.f32 0.0, %v331
  %v333 = vpop.f32.mrb[0].mxu0
  %v334 = vpop.f32.mrb[0].mxu0
  %v335 = vpop.f32.mrb[0].mxu0
  %336 = vdwg.mxu0
  %v337 = vlaneseq
  %v338 = vshrl.u32 %v337, 7
  %v339 = vsub.s32 0, %v338
  %v340 = vrot.slane %v332, %v339
  %v341 = vsub.f32 %v340, %v210
  %vm342 = vcmask 261120
  %v344 = vsel %vm342, %v270, 0
  %v347 = vsel %vm342, %v273, 0
  %v350 = vsel %vm342, %v278, 0
  %v353 = vsel %vm342, %v281, 0
  %355 = vmatprep.subr.mxu0 0.0
  %356 = vmatpush1.xpose.msra.mxu0 %v344
  %357 = vmatprep.subr.mxu0 0.0
  %358 = vmatpush1.xpose.msra.mxu0 %v347
  %359 = vmatprep.subr.mxu0 0.0
  %360 = vmatpush1.xpose.msra.mxu0 %v350
  %361 = vmatprep.subr.mxu0 0.0
  %362 = vmatpush1.xpose.msra.mxu0 %v353
  %363 = vmatprep.subr.mxu0 0.0
  %364 = vmatpush1.xpose.msra.mxu0 0.0
  %365 = vmatprep.subr.mxu0 0.0
  %366 = vmatpush1.xpose.msra.mxu0 0.0
  %367 = vmatprep.subr.mxu0 0.0
  %368 = vmatpush1.xpose.msra.mxu0 0.0
  %369 = vmatprep.subr.mxu0 0.0
  %370 = vmatpush1.xpose.msra.mxu0 0.0
  %371 = vmatprep.subr.mxu0 0.0
  %372 = vmatpush1.xpose.msra.mxu0 0.0
  %373 = vmatprep.subr.mxu0 0.0
  %374 = vmatpush1.xpose.msra.mxu0 0.0
  %375 = vmatprep.subr.mxu0 0.0
  %376 = vmatpush1.xpose.msra.mxu0 0.0
  %377 = vmatprep.subr.mxu0 0.0
  %378 = vmatpush1.xpose.msra.mxu0 0.0
  %379 = vmatprep.subr.mxu0 0.0
  %380 = vmatpush1.xpose.msra.mxu0 0.0
  %381 = vmatprep.subr.mxu0 0.0
  %382 = vmatpush1.xpose.msra.mxu0 0.0
  %383 = vmatprep.subr.mxu0 0.0
  %384 = vmatpush1.xpose.msra.mxu0 0.0
  %385 = vmatprep.subr.mxu0 0.0
  %386 = vmatpush1.xpose.msra.mxu0 0.0
  %387 = vmatprep.subr.mxu0 0.0
  %388 = vmatpush1.xpose.msra.mxu0 0.0
  %389 = vmatprep.subr.mxu0 0.0
  %390 = vmatpush1.xpose.msra.mxu0 0.0
  %391 = vmatprep.subr.mxu0 0.0
  %392 = vmatpush1.xpose.msra.mxu0 0.0
  %393 = vmatprep.subr.mxu0 0.0
  %394 = vmatpush1.xpose.msra.mxu0 0.0
  %395 = vmatprep.subr.mxu0 0.0
  %396 = vmatpush1.xpose.msra.mxu0 0.0
  %397 = vmatprep.subr.mxu0 0.0
  %398 = vmatpush1.xpose.msra.mxu0 0.0
  %399 = vmatprep.subr.mxu0 0.0
  %400 = vmatpush1.xpose.msra.mxu0 0.0
  %401 = vmatprep.subr.mxu0 0.0
  %402 = vmatpush1.xpose.msra.mxu0 0.0
  %403 = vmatprep.subr.mxu0 0.0
  %404 = vmatpush1.xpose.msra.mxu0 0.0
  %405 = vmatprep.subr.mxu0 0.0
  %406 = vmatpush1.xpose.msra.mxu0 0.0
  %407 = vmatprep.subr.mxu0 0.0
  %408 = vmatpush1.xpose.msra.mxu0 0.0
  %409 = vmatprep.subr.mxu0 0.0
  %410 = vmatpush1.xpose.msra.mxu0 0.0
  %411 = vmatprep.subr.mxu0 0.0
  %412 = vmatpush1.xpose.msra.mxu0 0.0
  %413 = vmatprep.subr.mxu0 0.0
  %414 = vmatpush1.xpose.msra.mxu0 0.0
  %415 = vmatprep.subr.mxu0 0.0
  %416 = vmatpush1.xpose.msra.mxu0 0.0
  %417 = vmatprep.subr.mxu0 0.0
  %418 = vmatpush1.xpose.msra.mxu0 0.0
  %419 = vmatprep.mubr.f32.mxu0 0.0
  %420 = vmatmul.mubr.f32.gmra.mrb[0].mxu0 %v344
  %v421 = vpop.f32.mrb[0].mxu0
  %v422 = vadd.f32 0.0, %v421
  %v423 = vpop.f32.mrb[0].mxu0
  %424 = vmatprep.mubr.f32.mxu0 0.0
  %425 = vmatmul.mubr.f32.gmra.mrb[0].mxu0 %v347
  %v426 = vpop.f32.mrb[0].mxu0
  %v427 = vadd.f32 0.0, %v426
  %v428 = vpop.f32.mrb[0].mxu0
  %429 = vmatprep.mubr.f32.mxu0 0.0
  %430 = vmatmul.mubr.f32.gmra.mrb[0].mxu0 %v350
  %v431 = vpop.f32.mrb[0].mxu0
  %v432 = vadd.f32 0.0, %v431
  %v433 = vpop.f32.mrb[0].mxu0
  %434 = vmatprep.mubr.f32.mxu0 0.0
  %435 = vmatmul.mubr.f32.gmra.mrb[0].mxu0 %v353
  %v436 = vpop.f32.mrb[0].mxu0
  %v437 = vadd.f32 0.0, %v436
  %v438 = vpop.f32.mrb[0].mxu0
  %439 = vdwg.mxu0
  %v440 = vmul.f32 %v422, 2.0
  %v441 = vmul.f32 %v427, 2.0
  %v442 = vmul.f32 %v432, 2.0
  %v443 = vmul.f32 %v437, 2.0
  %v445 = vsel %vm342, %v341, 0
  %447 = vmatprep.subr.mxu0 0.0
  %448 = vmatpush1.xpose.msra.mxu0 %v344
  %449 = vmatprep.subr.mxu0 0.0
  %450 = vmatpush1.xpose.msra.mxu0 %v347
  %451 = vmatprep.subr.mxu0 0.0
  %452 = vmatpush1.xpose.msra.mxu0 %v350
  %453 = vmatprep.subr.mxu0 0.0
  %454 = vmatpush1.xpose.msra.mxu0 %v353
  %455 = vmatprep.subr.mxu0 0.0
  %456 = vmatpush1.xpose.msra.mxu0 0.0
  %457 = vmatprep.subr.mxu0 0.0
  %458 = vmatpush1.xpose.msra.mxu0 0.0
  %459 = vmatprep.subr.mxu0 0.0
  %460 = vmatpush1.xpose.msra.mxu0 0.0
  %461 = vmatprep.subr.mxu0 0.0
  %462 = vmatpush1.xpose.msra.mxu0 0.0
  %463 = vmatprep.subr.mxu0 0.0
  %464 = vmatpush1.xpose.msra.mxu0 0.0
  %465 = vmatprep.subr.mxu0 0.0
  %466 = vmatpush1.xpose.msra.mxu0 0.0
  %467 = vmatprep.subr.mxu0 0.0
  %468 = vmatpush1.xpose.msra.mxu0 0.0
  %469 = vmatprep.subr.mxu0 0.0
  %470 = vmatpush1.xpose.msra.mxu0 0.0
  %471 = vmatprep.subr.mxu0 0.0
  %472 = vmatpush1.xpose.msra.mxu0 0.0
  %473 = vmatprep.subr.mxu0 0.0
  %474 = vmatpush1.xpose.msra.mxu0 0.0
  %475 = vmatprep.subr.mxu0 0.0
  %476 = vmatpush1.xpose.msra.mxu0 0.0
  %477 = vmatprep.subr.mxu0 0.0
  %478 = vmatpush1.xpose.msra.mxu0 0.0
  %479 = vmatprep.subr.mxu0 0.0
  %480 = vmatpush1.xpose.msra.mxu0 0.0
  %481 = vmatprep.subr.mxu0 0.0
  %482 = vmatpush1.xpose.msra.mxu0 0.0
  %483 = vmatprep.subr.mxu0 0.0
  %484 = vmatpush1.xpose.msra.mxu0 0.0
  %485 = vmatprep.subr.mxu0 0.0
  %486 = vmatpush1.xpose.msra.mxu0 0.0
  %487 = vmatprep.subr.mxu0 0.0
  %488 = vmatpush1.xpose.msra.mxu0 0.0
  %489 = vmatprep.subr.mxu0 0.0
  %490 = vmatpush1.xpose.msra.mxu0 0.0
  %491 = vmatprep.subr.mxu0 0.0
  %492 = vmatpush1.xpose.msra.mxu0 0.0
  %493 = vmatprep.subr.mxu0 0.0
  %494 = vmatpush1.xpose.msra.mxu0 0.0
  %495 = vmatprep.subr.mxu0 0.0
  %496 = vmatpush1.xpose.msra.mxu0 0.0
  %497 = vmatprep.subr.mxu0 0.0
  %498 = vmatpush1.xpose.msra.mxu0 0.0
  %499 = vmatprep.subr.mxu0 0.0
  %500 = vmatpush1.xpose.msra.mxu0 0.0
  %501 = vmatprep.subr.mxu0 0.0
  %502 = vmatpush1.xpose.msra.mxu0 0.0
  %503 = vmatprep.subr.mxu0 0.0
  %504 = vmatpush1.xpose.msra.mxu0 0.0
  %505 = vmatprep.subr.mxu0 0.0
  %506 = vmatpush1.xpose.msra.mxu0 0.0
  %507 = vmatprep.subr.mxu0 0.0
  %508 = vmatpush1.xpose.msra.mxu0 0.0
  %509 = vmatprep.subr.mxu0 0.0
  %510 = vmatpush1.xpose.msra.mxu0 0.0
  %511 = vmatprep.mubr.f32.mxu0 0.0
  %512 = vmatmul.mubr.f32.gmra.mrb[0].mxu0 %v445
  %v513 = vpop.f32.mrb[0].mxu0
  %v514 = vadd.f32 0.0, %v513
  %v515 = vpop.f32.mrb[0].mxu0
  %516 = vdwg.mxu0
  %v517 = vmul.f32 %v514, 2.0
  %v519 = vsel %vm342, %v65, 0
  %521 = vmatprep.subr.mxu0 0.0
  %522 = vmatpush1.msra.mxu0 %v440
  %523 = vmatprep.subr.mxu0 0.0
  %524 = vmatpush1.msra.mxu0 %v441
  %525 = vmatprep.subr.mxu0 0.0
  %526 = vmatpush1.msra.mxu0 %v442
  %527 = vmatprep.subr.mxu0 0.0
  %528 = vmatpush1.msra.mxu0 %v443
  %529 = vmatprep.subr.mxu0 0.0
  %530 = vmatpush1.msra.mxu0 0.0
  %531 = vmatprep.subr.mxu0 0.0
  %532 = vmatpush1.msra.mxu0 0.0
  %533 = vmatprep.subr.mxu0 0.0
  %534 = vmatpush1.msra.mxu0 0.0
  %535 = vmatprep.subr.mxu0 0.0
  %536 = vmatpush1.msra.mxu0 0.0
  %537 = vmatprep.subr.mxu0 0.0
  %538 = vmatpush1.msra.mxu0 0.0
  %539 = vmatprep.subr.mxu0 0.0
  %540 = vmatpush1.msra.mxu0 0.0
  %541 = vmatprep.subr.mxu0 0.0
  %542 = vmatpush1.msra.mxu0 0.0
  %543 = vmatprep.subr.mxu0 0.0
  %544 = vmatpush1.msra.mxu0 0.0
  %545 = vmatprep.subr.mxu0 0.0
  %546 = vmatpush1.msra.mxu0 0.0
  %547 = vmatprep.subr.mxu0 0.0
  %548 = vmatpush1.msra.mxu0 0.0
  %549 = vmatprep.subr.mxu0 0.0
  %550 = vmatpush1.msra.mxu0 0.0
  %551 = vmatprep.subr.mxu0 0.0
  %552 = vmatpush1.msra.mxu0 0.0
  %553 = vmatprep.subr.mxu0 0.0
  %554 = vmatpush1.msra.mxu0 0.0
  %555 = vmatprep.subr.mxu0 0.0
  %556 = vmatpush1.msra.mxu0 0.0
  %557 = vmatprep.subr.mxu0 0.0
  %558 = vmatpush1.msra.mxu0 0.0
  %559 = vmatprep.subr.mxu0 0.0
  %560 = vmatpush1.msra.mxu0 0.0
  %561 = vmatprep.subr.mxu0 0.0
  %562 = vmatpush1.msra.mxu0 0.0
  %563 = vmatprep.subr.mxu0 0.0
  %564 = vmatpush1.msra.mxu0 0.0
  %565 = vmatprep.subr.mxu0 0.0
  %566 = vmatpush1.msra.mxu0 0.0
  %567 = vmatprep.subr.mxu0 0.0
  %568 = vmatpush1.msra.mxu0 0.0
  %569 = vmatprep.subr.mxu0 0.0
  %570 = vmatpush1.msra.mxu0 0.0
  %571 = vmatprep.subr.mxu0 0.0
  %572 = vmatpush1.msra.mxu0 0.0
  %573 = vmatprep.subr.mxu0 0.0
  %574 = vmatpush1.msra.mxu0 0.0
  %575 = vmatprep.subr.mxu0 0.0
  %576 = vmatpush1.msra.mxu0 0.0
  %577 = vmatprep.subr.mxu0 0.0
  %578 = vmatpush1.msra.mxu0 0.0
  %579 = vmatprep.subr.mxu0 0.0
  %580 = vmatpush1.msra.mxu0 0.0
  %581 = vmatprep.subr.mxu0 0.0
  %582 = vmatpush1.msra.mxu0 0.0
  %583 = vmatprep.subr.mxu0 0.0
  %584 = vmatpush1.msra.mxu0 0.0
  %585 = vmatprep.mubr.f32.mxu0 0.0
  %586 = vmatmul.mubr.f32.gmra.mrb[0].mxu0 %v519
  %v587 = vpop.f32.mrb[0].mxu0
  %v588 = vadd.f32 %v517, %v587
  %v589 = vpop.f32.mrb[0].mxu0
  %590 = vdwg.mxu0
  %v591 = vmul.f32 %v588, 0.1
  %v592 = vsub.f32 %v65, %v591
  %v593 = vmax.f32 %v592, -1.0
  %v594 = vmin.f32 %v593, 1.0
  %v596 = vsel %vm342, %v594, 0
  %598 = vmatprep.subr.mxu0 0.0
  %599 = vmatpush1.msra.mxu0 %v440
  %600 = vmatprep.subr.mxu0 0.0
  %601 = vmatpush1.msra.mxu0 %v441
  %602 = vmatprep.subr.mxu0 0.0
  %603 = vmatpush1.msra.mxu0 %v442
  %604 = vmatprep.subr.mxu0 0.0
  %605 = vmatpush1.msra.mxu0 %v443
  %606 = vmatprep.subr.mxu0 0.0
  %607 = vmatpush1.msra.mxu0 0.0
  %608 = vmatprep.subr.mxu0 0.0
  %609 = vmatpush1.msra.mxu0 0.0
  %610 = vmatprep.subr.mxu0 0.0
  %611 = vmatpush1.msra.mxu0 0.0
  %612 = vmatprep.subr.mxu0 0.0
  %613 = vmatpush1.msra.mxu0 0.0
  %614 = vmatprep.subr.mxu0 0.0
  %615 = vmatpush1.msra.mxu0 0.0
  %616 = vmatprep.subr.mxu0 0.0
  %617 = vmatpush1.msra.mxu0 0.0
  %618 = vmatprep.subr.mxu0 0.0
  %619 = vmatpush1.msra.mxu0 0.0
  %620 = vmatprep.subr.mxu0 0.0
  %621 = vmatpush1.msra.mxu0 0.0
  %622 = vmatprep.subr.mxu0 0.0
  %623 = vmatpush1.msra.mxu0 0.0
  %624 = vmatprep.subr.mxu0 0.0
  %625 = vmatpush1.msra.mxu0 0.0
  %626 = vmatprep.subr.mxu0 0.0
  %627 = vmatpush1.msra.mxu0 0.0
  %628 = vmatprep.subr.mxu0 0.0
  %629 = vmatpush1.msra.mxu0 0.0
  %630 = vmatprep.subr.mxu0 0.0
  %631 = vmatpush1.msra.mxu0 0.0
  %632 = vmatprep.subr.mxu0 0.0
  %633 = vmatpush1.msra.mxu0 0.0
  %634 = vmatprep.subr.mxu0 0.0
  %635 = vmatpush1.msra.mxu0 0.0
  %636 = vmatprep.subr.mxu0 0.0
  %637 = vmatpush1.msra.mxu0 0.0
  %638 = vmatprep.subr.mxu0 0.0
  %639 = vmatpush1.msra.mxu0 0.0
  %640 = vmatprep.subr.mxu0 0.0
  %641 = vmatpush1.msra.mxu0 0.0
  %642 = vmatprep.subr.mxu0 0.0
  %643 = vmatpush1.msra.mxu0 0.0
  %644 = vmatprep.subr.mxu0 0.0
  %645 = vmatpush1.msra.mxu0 0.0
  %646 = vmatprep.subr.mxu0 0.0
  %647 = vmatpush1.msra.mxu0 0.0
  %648 = vmatprep.subr.mxu0 0.0
  %649 = vmatpush1.msra.mxu0 0.0
  %650 = vmatprep.subr.mxu0 0.0
  %651 = vmatpush1.msra.mxu0 0.0
  %652 = vmatprep.subr.mxu0 0.0
  %653 = vmatpush1.msra.mxu0 0.0
  %654 = vmatprep.subr.mxu0 0.0
  %655 = vmatpush1.msra.mxu0 0.0
  %656 = vmatprep.subr.mxu0 0.0
  %657 = vmatpush1.msra.mxu0 0.0
  %658 = vmatprep.subr.mxu0 0.0
  %659 = vmatpush1.msra.mxu0 0.0
  %660 = vmatprep.subr.mxu0 0.0
  %661 = vmatpush1.msra.mxu0 0.0
  %662 = vmatprep.mubr.f32.mxu0 0.0
  %663 = vmatmul.mubr.f32.gmra.mrb[0].mxu0 %v596
  %v664 = vpop.f32.mrb[0].mxu0
  %v665 = vadd.f32 %v517, %v664
  %v666 = vpop.f32.mrb[0].mxu0
  %667 = vdwg.mxu0
  %v668 = vmul.f32 %v665, 0.1
  %v669 = vsub.f32 %v594, %v668
  %v670 = vmax.f32 %v669, -1.0
  %v671 = vmin.f32 %v670, 1.0
  %v673 = vsel %vm342, %v671, 0
  %675 = vmatprep.subr.mxu0 0.0
  %676 = vmatpush1.msra.mxu0 %v440
  %677 = vmatprep.subr.mxu0 0.0
  %678 = vmatpush1.msra.mxu0 %v441
  %679 = vmatprep.subr.mxu0 0.0
  %680 = vmatpush1.msra.mxu0 %v442
  %681 = vmatprep.subr.mxu0 0.0
  %682 = vmatpush1.msra.mxu0 %v443
  %683 = vmatprep.subr.mxu0 0.0
  %684 = vmatpush1.msra.mxu0 0.0
  %685 = vmatprep.subr.mxu0 0.0
  %686 = vmatpush1.msra.mxu0 0.0
  %687 = vmatprep.subr.mxu0 0.0
  %688 = vmatpush1.msra.mxu0 0.0
  %689 = vmatprep.subr.mxu0 0.0
  %690 = vmatpush1.msra.mxu0 0.0
  %691 = vmatprep.subr.mxu0 0.0
  %692 = vmatpush1.msra.mxu0 0.0
  %693 = vmatprep.subr.mxu0 0.0
  %694 = vmatpush1.msra.mxu0 0.0
  %695 = vmatprep.subr.mxu0 0.0
  %696 = vmatpush1.msra.mxu0 0.0
  %697 = vmatprep.subr.mxu0 0.0
  %698 = vmatpush1.msra.mxu0 0.0
  %699 = vmatprep.subr.mxu0 0.0
  %700 = vmatpush1.msra.mxu0 0.0
  %701 = vmatprep.subr.mxu0 0.0
  %702 = vmatpush1.msra.mxu0 0.0
  %703 = vmatprep.subr.mxu0 0.0
  %704 = vmatpush1.msra.mxu0 0.0
  %705 = vmatprep.subr.mxu0 0.0
  %706 = vmatpush1.msra.mxu0 0.0
  %707 = vmatprep.subr.mxu0 0.0
  %708 = vmatpush1.msra.mxu0 0.0
  %709 = vmatprep.subr.mxu0 0.0
  %710 = vmatpush1.msra.mxu0 0.0
  %711 = vmatprep.subr.mxu0 0.0
  %712 = vmatpush1.msra.mxu0 0.0
  %713 = vmatprep.subr.mxu0 0.0
  %714 = vmatpush1.msra.mxu0 0.0
  %715 = vmatprep.subr.mxu0 0.0
  %716 = vmatpush1.msra.mxu0 0.0
  %717 = vmatprep.subr.mxu0 0.0
  %718 = vmatpush1.msra.mxu0 0.0
  %719 = vmatprep.subr.mxu0 0.0
  %720 = vmatpush1.msra.mxu0 0.0
  %721 = vmatprep.subr.mxu0 0.0
  %722 = vmatpush1.msra.mxu0 0.0
  %723 = vmatprep.subr.mxu0 0.0
  %724 = vmatpush1.msra.mxu0 0.0
  %725 = vmatprep.subr.mxu0 0.0
  %726 = vmatpush1.msra.mxu0 0.0
  %727 = vmatprep.subr.mxu0 0.0
  %728 = vmatpush1.msra.mxu0 0.0
  %729 = vmatprep.subr.mxu0 0.0
  %730 = vmatpush1.msra.mxu0 0.0
  %731 = vmatprep.subr.mxu0 0.0
  %732 = vmatpush1.msra.mxu0 0.0
  %733 = vmatprep.subr.mxu0 0.0
  %734 = vmatpush1.msra.mxu0 0.0
  %735 = vmatprep.subr.mxu0 0.0
  %736 = vmatpush1.msra.mxu0 0.0
  %737 = vmatprep.subr.mxu0 0.0
  %738 = vmatpush1.msra.mxu0 0.0
  %739 = vmatprep.mubr.f32.mxu0 0.0
  %740 = vmatmul.mubr.f32.gmra.mrb[0].mxu0 %v673
  %v741 = vpop.f32.mrb[0].mxu0
  %v742 = vadd.f32 %v517, %v741
  %v743 = vpop.f32.mrb[0].mxu0
  %744 = vdwg.mxu0
  %v745 = vmul.f32 %v742, 0.1
  %v746 = vsub.f32 %v671, %v745
  %v747 = vmax.f32 %v746, -1.0
  %v748 = vmin.f32 %v747, 1.0
  %vm749 = vcmask 254976
  %750 = vst.msk [vmem:[#allocation2] sm:$0x3] %vm749, %v748
  %751 = vst.msk [vmem:[#allocation2 + $0x2] sm:$0x3] %vm749, %v65
  %v752 = vld [vmem:[#allocation2] sm:$0xf]
  %v753 = vpack.c.bf16 %v752, %v752
  %v755 = vsel %vm342, %v753, 0
  %757 = vmatprep.subr.bf16.mxu0 %v228
  %758 = vmatpush1.bf16.msra.mxu0 %v227
  %759 = vmatprep.subr.bf16.mxu0 %v230
  %760 = vmatpush1.bf16.msra.mxu0 %v229
  %761 = vmatprep.subr.bf16.mxu0 0
  %762 = vmatpush1.bf16.msra.mxu0 0
  %763 = vmatprep.subr.bf16.mxu0 0
  %764 = vmatpush1.bf16.msra.mxu0 0
  %765 = vmatprep.subr.bf16.mxu0 0
  %766 = vmatpush1.bf16.msra.mxu0 0
  %767 = vmatprep.subr.bf16.mxu0 0
  %768 = vmatpush1.bf16.msra.mxu0 0
  %769 = vmatprep.subr.bf16.mxu0 0
  %770 = vmatpush1.bf16.msra.mxu0 0
  %771 = vmatprep.subr.bf16.mxu0 0
  %772 = vmatpush1.bf16.msra.mxu0 0
  %773 = vmatprep.subr.bf16.mxu0 0
  %774 = vmatpush1.bf16.msra.mxu0 0
  %775 = vmatprep.subr.bf16.mxu0 0
  %776 = vmatpush1.bf16.msra.mxu0 0
  %777 = vmatprep.subr.bf16.mxu0 0
  %778 = vmatpush1.bf16.msra.mxu0 0
  %779 = vmatprep.subr.bf16.mxu0 0
  %780 = vmatpush1.bf16.msra.mxu0 0
  %781 = vmatprep.subr.bf16.mxu0 0
  %782 = vmatpush1.bf16.msra.mxu0 0
  %783 = vmatprep.subr.bf16.mxu0 0
  %784 = vmatpush1.bf16.msra.mxu0 0
  %785 = vmatprep.subr.bf16.mxu0 0
  %786 = vmatpush1.bf16.msra.mxu0 0
  %787 = vmatprep.subr.bf16.mxu0 0
  %788 = vmatpush1.bf16.msra.mxu0 0
  %789 = vmatprep.mubr.bf16.mxu0 0
  %790 = vmatmul.mubr.bf16.gmra.mrb[0].mxu0 %v755
  %v791 = vpop.f32.mrb[0].mxu0
  %v792 = vadd.f32 %v288, %v791
  %v793 = vpop.f32.mrb[0].mxu0
  %v794 = vadd.f32 %v292, %v793
  %v795 = vpop.f32.mrb[0].mxu0
  %v796 = vpop.f32.mrb[0].mxu0
  %797 = vdwg.mxu0
  %v799 = vsel %vm342, %v748, 0
  %801 = vmatprep.subr.mxu0 0.0
  %802 = vmatpush1.msra.mxu0 %v270
  %803 = vmatprep.subr.mxu0 0.0
  %804 = vmatpush1.msra.mxu0 %v273
  %805 = vmatprep.subr.mxu0 0.0
  %806 = vmatpush1.msra.mxu0 %v278
  %807 = vmatprep.subr.mxu0 0.0
  %808 = vmatpush1.msra.mxu0 %v281
  %809 = vmatprep.subr.mxu0 0.0
  %810 = vmatpush1.msra.mxu0 0.0
  %811 = vmatprep.subr.mxu0 0.0
  %812 = vmatpush1.msra.mxu0 0.0
  %813 = vmatprep.subr.mxu0 0.0
  %814 = vmatpush1.msra.mxu0 0.0
  %815 = vmatprep.subr.mxu0 0.0
  %816 = vmatpush1.msra.mxu0 0.0
  %817 = vmatprep.subr.mxu0 0.0
  %818 = vmatpush1.msra.mxu0 0.0
  %819 = vmatprep.subr.mxu0 0.0
  %820 = vmatpush1.msra.mxu0 0.0
  %821 = vmatprep.subr.mxu0 0.0
  %822 = vmatpush1.msra.mxu0 0.0
  %823 = vmatprep.subr.mxu0 0.0
  %824 = vmatpush1.msra.mxu0 0.0
  %825 = vmatprep.subr.mxu0 0.0
  %826 = vmatpush1.msra.mxu0 0.0
  %827 = vmatprep.subr.mxu0 0.0
  %828 = vmatpush1.msra.mxu0 0.0
  %829 = vmatprep.subr.mxu0 0.0
  %830 = vmatpush1.msra.mxu0 0.0
  %831 = vmatprep.subr.mxu0 0.0
  %832 = vmatpush1.msra.mxu0 0.0
  %833 = vmatprep.subr.mxu0 0.0
  %834 = vmatpush1.msra.mxu0 0.0
  %835 = vmatprep.subr.mxu0 0.0
  %836 = vmatpush1.msra.mxu0 0.0
  %837 = vmatprep.subr.mxu0 0.0
  %838 = vmatpush1.msra.mxu0 0.0
  %839 = vmatprep.subr.mxu0 0.0
  %840 = vmatpush1.msra.mxu0 0.0
  %841 = vmatprep.subr.mxu0 0.0
  %842 = vmatpush1.msra.mxu0 0.0
  %843 = vmatprep.subr.mxu0 0.0
  %844 = vmatpush1.msra.mxu0 0.0
  %845 = vmatprep.subr.mxu0 0.0
  %846 = vmatpush1.msra.mxu0 0.0
  %847 = vmatprep.subr.mxu0 0.0
  %848 = vmatpush1.msra.mxu0 0.0
  %849 = vmatprep.subr.mxu0 0.0
  %850 = vmatpush1.msra.mxu0 0.0
  %851 = vmatprep.subr.mxu0 0.0
  %852 = vmatpush1.msra.mxu0 0.0
  %853 = vmatprep.subr.mxu0 0.0
  %854 = vmatpush1.msra.mxu0 0.0
  %855 = vmatprep.subr.mxu0 0.0
  %856 = vmatpush1.msra.mxu0 0.0
  %857 = vmatprep.subr.mxu0 0.0
  %858 = vmatpush1.msra.mxu0 0.0
  %859 = vmatprep.subr.mxu0 0.0
  %860 = vmatpush1.msra.mxu0 0.0
  %861 = vmatprep.subr.mxu0 0.0
  %862 = vmatpush1.msra.mxu0 0.0
  %863 = vmatprep.subr.mxu0 0.0
  %864 = vmatpush1.msra.mxu0 0.0
  %865 = vmatprep.mubr.f32.mxu0 0.0
  %866 = vmatmul.mubr.f32.gmra.mrb[0].mxu0 %v799
  %v867 = vpop.f32.mrb[0].mxu0
  %v868 = vadd.f32 %v340, %v867
  %v869 = vpop.f32.mrb[0].mxu0
  %870 = vdwg.mxu0
  %871 = vmatprep.subr.mxu0 0.0
  %872 = vmatpush1.msra.mxu0 %v270
  %873 = vmatprep.subr.mxu0 0.0
  %874 = vmatpush1.msra.mxu0 %v273
  %875 = vmatprep.subr.mxu0 0.0
  %876 = vmatpush1.msra.mxu0 %v278
  %877 = vmatprep.subr.mxu0 0.0
  %878 = vmatpush1.msra.mxu0 %v281
  %879 = vmatprep.subr.mxu0 0.0
  %880 = vmatpush1.msra.mxu0 0.0
  %881 = vmatprep.subr.mxu0 0.0
  %882 = vmatpush1.msra.mxu0 0.0
  %883 = vmatprep.subr.mxu0 0.0
  %884 = vmatpush1.msra.mxu0 0.0
  %885 = vmatprep.subr.mxu0 0.0
  %886 = vmatpush1.msra.mxu0 0.0
  %887 = vmatprep.subr.mxu0 0.0
  %888 = vmatpush1.msra.mxu0 0.0
  %889 = vmatprep.subr.mxu0 0.0
  %890 = vmatpush1.msra.mxu0 0.0
  %891 = vmatprep.subr.mxu0 0.0
  %892 = vmatpush1.msra.mxu0 0.0
  %893 = vmatprep.subr.mxu0 0.0
  %894 = vmatpush1.msra.mxu0 0.0
  %895 = vmatprep.subr.mxu0 0.0
  %896 = vmatpush1.msra.mxu0 0.0
  %897 = vmatprep.subr.mxu0 0.0
  %898 = vmatpush1.msra.mxu0 0.0
  %899 = vmatprep.subr.mxu0 0.0
  %900 = vmatpush1.msra.mxu0 0.0
  %901 = vmatprep.subr.mxu0 0.0
  %902 = vmatpush1.msra.mxu0 0.0
  %903 = vmatprep.subr.mxu0 0.0
  %904 = vmatpush1.msra.mxu0 0.0
  %905 = vmatprep.subr.mxu0 0.0
  %906 = vmatpush1.msra.mxu0 0.0
  %907 = vmatprep.subr.mxu0 0.0
  %908 = vmatpush1.msra.mxu0 0.0
  %909 = vmatprep.subr.mxu0 0.0
  %910 = vmatpush1.msra.mxu0 0.0
  %911 = vmatprep.subr.mxu0 0.0
  %912 = vmatpush1.msra.mxu0 0.0
  %913 = vmatprep.subr.mxu0 0.0
  %914 = vmatpush1.msra.mxu0 0.0
  %915 = vmatprep.subr.mxu0 0.0
  %916 = vmatpush1.msra.mxu0 0.0
  %917 = vmatprep.subr.mxu0 0.0
  %918 = vmatpush1.msra.mxu0 0.0
  %919 = vmatprep.subr.mxu0 0.0
  %920 = vmatpush1.msra.mxu0 0.0
  %921 = vmatprep.subr.mxu0 0.0
  %922 = vmatpush1.msra.mxu0 0.0
  %923 = vmatprep.subr.mxu0 0.0
  %924 = vmatpush1.msra.mxu0 0.0
  %925 = vmatprep.subr.mxu0 0.0
  %926 = vmatpush1.msra.mxu0 0.0
  %927 = vmatprep.subr.mxu0 0.0
  %928 = vmatpush1.msra.mxu0 0.0
  %929 = vmatprep.subr.mxu0 0.0
  %930 = vmatpush1.msra.mxu0 0.0
  %931 = vmatprep.subr.mxu0 0.0
  %932 = vmatpush1.msra.mxu0 0.0
  %933 = vmatprep.subr.mxu0 0.0
  %934 = vmatpush1.msra.mxu0 0.0
  %935 = vmatprep.mubr.f32.mxu0 0.0
  %936 = vmatmul.mubr.f32.gmra.mrb[0].mxu0 %v519
  %v937 = vpop.f32.mrb[0].mxu0
  %v938 = vadd.f32 %v340, %v937
  %v939 = vpop.f32.mrb[0].mxu0
  %940 = vdwg.mxu0
  %v941 = vsub.f32 %v210, %v868
  %v942 = vmul.f32 %v941, %v941
  %v943 = vsel %vm749, %v942, 0.0
  %944 = vadd.xlane.f32.xlu0 %v943
  %v945 = vpop.xlane.xlu0 %944
  %vm946 = vcmask 1024
  %947 = vst.msk [vmem:[%s5] sm:$0x3] %vm946, %v945
  %v950 = vrot.slane %v792, 2
  %v951 = vrot.slane %v794, 2
  %v954 = vsub.f32 %v792, %v950
  %v955 = vsub.f32 %v794, %v951
  %v956 = vsub.f32 %v868, %v938
  %v957 = vmul.f32 %v954, %v954
  %v958 = vmul.f32 %v955, %v955
  %vm959 = vcmask 1041408
  %v960 = vsel %vm959, %v957, 0.0
  %v961 = vsel %vm959, %v958, 0.0
  %v962 = vadd.f32 %v960, %v961
  %963 = vadd.xlane.f32.xlu0 %v962
  %v964 = vpop.xlane.xlu0 %963
  %v965 = vrsqrt.pop %v964
  %v966 = vmul.f32 %v964, %v965
  %vm967 = vcmp.eq.f32.partialorder %v964, inf
  %v968 = vsel %vm967, %v964, %v966
  %vm969 = vcmp.eq.f32.partialorder %v964, 0.0
  %v970 = vand.u32 %v964, 2147483648
  %v971 = vsel %vm969, %v970, %v968
  %v972 = vmul.f32 %v956, %v956
  %v973 = vsel %vm749, %v972, 0.0
  %974 = vadd.xlane.f32.xlu0 %v973
  %v975 = vpop.xlane.xlu0 %974
  %v976 = vrsqrt.pop %v975
  %v977 = vmul.f32 %v975, %v976
  %vm978 = vcmp.eq.f32.partialorder %v975, inf
  %v979 = vsel %vm978, %v975, %v977
  %vm980 = vcmp.eq.f32.partialorder %v975, 0.0
  %v981 = vand.u32 %v975, 2147483648
  %v982 = vsel %vm980, %v981, %v979
  %v983 = vsub.f32 %v971, %v982
  %v984 = vmul.f32 %v983, %v983
  %985 = vst.msk [vmem:[%s6] sm:$0x3] %vm946, %v984
  %v986 = vsub.f32 %v792, %v73
  %v987 = vsub.f32 %v794, %v74
  %v988 = vsub.f32 %v868, %v210
  %v989 = vmul.f32 %v986, %v986
  %v990 = vmul.f32 %v987, %v987
  %v991 = vsel %vm959, %v989, 0.0
  %v992 = vsel %vm959, %v990, 0.0
  %v993 = vadd.f32 %v991, %v992
  %994 = vadd.xlane.f32.xlu0 %v993
  %v995 = vpop.xlane.xlu0 %994
  %v996 = vrsqrt.pop %v995
  %v997 = vmul.f32 %v995, %v996
  %vm998 = vcmp.eq.f32.partialorder %v995, inf
  %v999 = vsel %vm998, %v995, %v997
  %vm1000 = vcmp.eq.f32.partialorder %v995, 0.0
  %v1001 = vand.u32 %v995, 2147483648
  %v1002 = vsel %vm1000, %v1001, %v999
  %v1003 = vmul.f32 %v988, %v988
  %v1004 = vsel %vm749, %v1003, 0.0
  %1005 = vadd.xlane.f32.xlu0 %v1004
  %v1006 = vpop.xlane.xlu0 %1005
  %v1007 = vrsqrt.pop %v1006
  %v1008 = vmul.f32 %v1006, %v1007
  %vm1009 = vcmp.eq.f32.partialorder %v1006, inf
  %v1010 = vsel %vm1009, %v1006, %v1008
  %vm1011 = vcmp.eq.f32.partialorder %v1006, 0.0
  %v1012 = vand.u32 %v1006, 2147483648
  %v1013 = vsel %vm1011, %v1012, %v1010
  %v1014 = vsub.f32 %v1002, %v1013
  %v1015 = vmul.f32 %v1014, %v1014
  %1016 = vst.msk [vmem:[%s7] sm:$0x3] %vm946, %v1015
  %v1017 = vcombine.low %v25, %v25
  %v1019 = vunpack.c.l.s4 1983009808
  %v1020 = vunpack.c.0.s8 %v1019
  %v1021 = vlaneseq
  %v1022 = vshrl.u32 %v1021, 7
  %v1023 = vsub.s32 %v1020, %v1022
  %v1024 = vrot.slane %v1017, %v1023
  %v1025 = vcombine.high %v1024, %v1024
  %v1028 = vsub.f32 %v792, %v1024
  %v1029 = vsub.f32 %v794, %v1025
  %v1030 = vsub.f32 %v938, %v210
  %v1031 = vmul.f32 %v1028, %v1028
  %v1032 = vmul.f32 %v1029, %v1029
  %vm1033 = vcmask 1043458
  %v1034 = vsel %vm1033, %v1031, 0.0
  %v1035 = vsel %vm1033, %v1032, 0.0
  %v1036 = vadd.f32 %v1034, %v1035
  %1037 = vadd.xlane.f32.xlu0 %v1036
  %v1038 = vpop.xlane.xlu0 %1037
  %v1039 = vrsqrt.pop %v1038
  %v1040 = vmul.f32 %v1038, %v1039
  %vm1041 = vcmp.eq.f32.partialorder %v1038, inf
  %v1042 = vsel %vm1041, %v1038, %v1040
  %vm1043 = vcmp.eq.f32.partialorder %v1038, 0.0
  %v1044 = vand.u32 %v1038, 2147483648
  %v1045 = vsel %vm1043, %v1044, %v1042
  %v1046 = vmul.f32 %v1030, %v1030
  %v1047 = vsel %vm749, %v1046, 0.0
  %1048 = vadd.xlane.f32.xlu0 %v1047
  %v1049 = vpop.xlane.xlu0 %1048
  %v1050 = vrsqrt.pop %v1049
  %v1051 = vmul.f32 %v1049, %v1050
  %vm1052 = vcmp.eq.f32.partialorder %v1049, inf
  %v1053 = vsel %vm1052, %v1049, %v1051
  %vm1054 = vcmp.eq.f32.partialorder %v1049, 0.0
  %v1055 = vand.u32 %v1049, 2147483648
  %v1056 = vsel %vm1054, %v1055, %v1053
  %v1058 = vrot.slane %v1056, 6
  %v1060 = vsub.f32 %v1045, %v1058
  %v1061 = vmul.f32 %v1060, %v1060
  %vm1062 = vcmask 3074
  %1063 = vst.msk [vmem:[%s8 - $0x2] sm:$0xc] %vm1062, %v1061
  // Predicated region
  $region22: #{training_net_forward.1} parent=0 // pred_check
    _
  $region23: #{training_net_forward.1} parent=0 // pred_check_branch
    %1065 = sbr.rel (0) target = $region25
  $region24: #{training_net_forward.1} parent=0 // pred_region
    _
  $region25: #{training_net_forward.1} parent=0 // pred_fallthru
    _
  // Predicated region
  $region26: #{training_net_forward.1} parent=0 // pred_check
    _
  $region27: #{training_net_forward.1} parent=0 // pred_check_branch
    %1067 = sbr.rel (0) target = $region29
  $region28: #{training_net_forward.1} parent=0 // pred_region
    _
  $region29: #{training_net_forward.1} parent=0 // pred_fallthru
    _
  // Predicated region
  $region30: #{training_net_forward.1} parent=0 // pred_check
    _
  $region31: #{training_net_forward.1} parent=0 // pred_check_branch
    %1069 = sbr.rel (0) target = $region33
  $region32: #{training_net_forward.1} parent=0 // pred_region
    _
  $region33: #{training_net_forward.1} parent=0 // pred_fallthru
    _
  // Predicated region
  $region34: #{training_net_forward.1} parent=0 // pred_check
    _
  $region35: #{training_net_forward.1} parent=0 // pred_check_branch
    %1071 = sbr.rel (0) target = $region37
  $region36: #{training_net_forward.1} parent=0 // pred_region
    _
  $region37: #{training_net_forward.1} parent=0 // pred_fallthru
    _
  // Predicated region
  $region38: #{training_net_forward.1} parent=0 // pred_check
    _
  $region39: #{training_net_forward.1} parent=0 // pred_check_branch
    %1073 = sbr.rel (0) target = $region41
  $region40: #{training_net_forward.1} parent=0 // pred_region
    _
  $region41: #{training_net_forward.1} parent=0 // pred_fallthru
    _
  // Predicated region
  $region42: #{training_net_forward.1} parent=0 // pred_check
    _
  $region43: #{training_net_forward.1} parent=0 // pred_check_branch
    %1075 = sbr.rel (0) target = $region45
  $region44: #{training_net_forward.1} parent=0 // pred_region
    _
  $region45: #{training_net_forward.1} parent=0 // pred_fallthru
    _
  // Predicated region
  $region46: #{training_net_forward.1} parent=0 // pred_check
    _
  $region47: #{training_net_forward.1} parent=0 // pred_check_branch
    %1077 = sbr.rel (0) target = $region49
  $region48: #{training_net_forward.1} parent=0 // pred_region
    _
  $region49: #{training_net_forward.1} parent=0 // pred_fallthru
    _
  // Predicated region
  $region50: #{training_net_forward.1} parent=0 // pred_check
    _
  $region51: #{training_net_forward.1} parent=0 // pred_check_branch
    %1079 = sbr.rel (0) target = $region53
  $region52: #{training_net_forward.1} parent=0 // pred_region
    _
  $region53: #{training_net_forward.1} parent=0 // pred_fallthru
    _

</llo_original>
